<compile_context>
chip_gen: v7x
topology: tpu7x:2x2x1
jax: 0.10.0
libtpu: 0.0.40
codegen_flags: <defaults>
</compile_context>

<pallas_src>
import functools

import jax
import jax.numpy as jnp
from jax.experimental import pallas as pl
from jax.experimental.pallas import tpu as pltpu

_LANES = 128        # vreg lane width
_SUBLANES = 8       # vreg sublane depth (f32)
_VREG = _LANES * _SUBLANES  # 1024 f32 elements per vreg


def _sigmoid_kernel(x_ref, o_ref):
    # Elementwise sigmoid over the whole VMEM-resident tile.
    # exp lands on the EUP; everything else is VPU work.
    o_ref[...] = jax.nn.sigmoid(x_ref[...])


@functools.partial(jax.jit, static_argnames=())
def sigmoid_pallas(x_nchw: jnp.ndarray) -> jnp.ndarray:
    """Applies sigmoid elementwise to an NCHW tensor via a Pallas TPU kernel."""
    n, c, h, w = x_nchw.shape
    total = n * c * h * w

    # Pad the flat vector up to a whole number of (8, 128) vregs so the kernel
    # sees only full, unmasked vreg loads/stores.
    padded = pl.cdiv(total, _VREG) * _VREG
    flat = x_nchw.reshape(-1)
    if padded != total:
        flat = jnp.pad(flat, (0, padded - total))
    x2d = flat.reshape(padded // _LANES, _LANES)

    out2d = pl.pallas_call(
        _sigmoid_kernel,
        out_shape=jax.ShapeDtypeStruct(x2d.shape, x2d.dtype),
        in_specs=[pl.BlockSpec(memory_space=pltpu.MemorySpace.VMEM)],
        out_specs=pl.BlockSpec(memory_space=pltpu.MemorySpace.VMEM),
        # Elementwise, same shape/dtype: reuse the input buffer for the output.
        input_output_aliases={0: 0},
    )(x2d)

    # Strip the pad lanes and restore NCHW.
    return out2d.reshape(-1)[:total].reshape(n, c, h, w)


if __name__ == "__main__":
    key = jax.random.PRNGKey(0)
    # Shape matches the module's forward input: [1, 768, 1, 1], float32 (NCHW).
    x269 = jax.random.normal(key, (1, 768, 1, 1), dtype=jnp.float32)

    out = sigmoid_pallas(x269)
    out = jax.block_until_ready(out)

    # Correctness check against plain JAX sigmoid.
    ref = jax.nn.sigmoid(x269)
    assert out.shape == (1, 768, 1, 1)
    assert out.dtype == x269.dtype
    assert jnp.allclose(out, ref, atol=1e-6, rtol=1e-6)

    print("KERNEL_OK")
</pallas_src>

<mosaic_0001>
module attributes {stable_mosaic.version = 11 : i64} {
  func.func @_sigmoid_kernel(%arg0: memref<8x128xf32, #tpu.memory_space<vmem>>, %arg1: memref<8x128xf32, #tpu.memory_space<vmem>>) attributes {dimension_semantics = [], scalar_prefetch = 0 : i64, scratch_operands = 0 : i64, tpu.core_type = #tpu.core_type<tc>} {
    %c0 = arith.constant 0 : index
    %c0_0 = arith.constant 0 : index
    %0 = vector.load %arg0[%c0, %c0_0] : memref<8x128xf32, #tpu.memory_space<vmem>>, vector<8x128xf32>
    %1 = arith.negf %0 : vector<8x128xf32>
    %2 = math.exp %1 : vector<8x128xf32>
    %cst = arith.constant 1.000000e+00 : f32
    %3 = vector.broadcast %cst : f32 to vector<8x128xf32>
    %4 = arith.addf %3, %2 : vector<8x128xf32>
    %5 = arith.divf %3, %4 : vector<8x128xf32>
    %c0_1 = arith.constant 0 : index
    %c0_2 = arith.constant 0 : index
    %6 = vector.load %arg1[%c0_1, %c0_2] : memref<8x128xf32, #tpu.memory_space<vmem>>, vector<8x128xf32>
    tpu.vector_store %arg1[%c0_1, %c0_2], %5 {strides = array<i32>} : memref<8x128xf32, #tpu.memory_space<vmem>>, vector<8x128xf32>,
    return
  }
}

</mosaic_0001>

<llo_original>
// kernel: sigmoid_pallas.1
$region0: #{sigmoid_pallas.1}
  #allocation0 [shape = 'u32[]', space=smem, size = 0x4, offset = 0x4, fixed_abs, tag = 'smem constant byte address 0x4 - core index']
  #allocation1 [shape = 'u32[144,128]{1,0:T(1,128)}', space=vmem, size = 0x12000, scoped, tag = 'internal scratch']
  %s0 = inlined_call_operand.vmem [shape: f32[8,128], index: 0, kind: input, shape index: {}, may-alias: {0,1}]
  %s1 = inlined_call_operand.vmem [shape: f32[8,128], index: 1, kind: output, shape index: {}, may-alias: {0,1}]
  %s2 = sld [smem:[#allocation0]]
  $region14: #{sigmoid_pallas.1} parent=0
    _
  %s4 = ssub.s32 1, %s2
  %s5 = scalar_select 0, %s4, %s2
  // Predicated region
  $region2: #{sigmoid_pallas.1} parent=0 // pred_check
    _
  $region3: #{sigmoid_pallas.1} parent=0 // pred_check_branch
    %7 = sbr.rel (0) target = $region5
  $region4: #{sigmoid_pallas.1} parent=0 // pred_region
    _
  $region5: #{sigmoid_pallas.1} parent=0 // pred_fallthru
    _
  %v8 = vld [vmem:[%s0] sm:$0xff]
  %v9 = vxor.u32 %v8, 2147483648
  %v10 = vmul.f32 %v9, 1.442695
  %v11 = vpow.pop %v10
  %v12 = vadd.f32 %v11, 1.0
  %v13 = vrcp.pop %v12
  %v14 = vmul.f32 1.0, %v13
  %15 = vst [vmem:[%s1] sm:$0xff] %v14
  // Predicated region
  $region6: #{sigmoid_pallas.1} parent=0 // pred_check
    _
  $region7: #{sigmoid_pallas.1} parent=0 // pred_check_branch
    %17 = sbr.rel (0) target = $region9
  $region8: #{sigmoid_pallas.1} parent=0 // pred_region
    _
  $region9: #{sigmoid_pallas.1} parent=0 // pred_fallthru
    _
  // Predicated region
  $region10: #{sigmoid_pallas.1} parent=0 // pred_check
    _
  $region11: #{sigmoid_pallas.1} parent=0 // pred_check_branch
    %19 = sbr.rel (0) target = $region13
  $region12: #{sigmoid_pallas.1} parent=0 // pred_region
    _
  $region13: #{sigmoid_pallas.1} parent=0 // pred_fallthru
    _

</llo_original>
